<compile_context>
chip_gen: v5e
topology: v5e:2x2
jax: 0.10.0
libtpu: 0.0.40
codegen_flags: <defaults>
</compile_context>

<pallas_src>
import functools
import math

import jax
import jax.numpy as jnp
from jax.experimental import pallas as pl
from jax.experimental.pallas import tpu as pltpu


# ----------------------------- config ---------------------------------------
HIDDEN = 768
NUM_HEADS = 12
HEAD_DIM = HIDDEN // NUM_HEADS        # 64
INTERMEDIATE = 3072
NUM_LAYERS = 2                        # scaled down from 12 for a small demo
VOCAB = 1000
MAX_POS = 64
LN_EPS = 1e-12

_VMEM_LIMIT = 32 * 1024 * 1024        # explicit scoped VMEM; safe on v5e/v6e/v7x
_MAX_TN = 2304                        # bf16 weight block K*_MAX_TN*2B <= ~3.4 MiB
                                      # (x2 double-buffer still well under budget)


def _pick_tn(n):
    """Largest lane-aligned (multiple of 128) output tile <= _MAX_TN dividing n."""
    if n <= _MAX_TN:
        return n
    for t in range(_MAX_TN - _MAX_TN % 128, 127, -128):
        if n % t == 0:
            return t
    return n


# ------------- Pallas kernel: single-step matmul + bias + fused act ----------
def _matmul_bias_act_kernel(x_ref, w_ref, b_ref, o_ref, *, act):
    # Full K per grid step (weights fit VMEM) -> no k-loop, no accumulator scratch.
    y = jnp.dot(x_ref[...], w_ref[...], preferred_element_type=jnp.float32)
    y = y + b_ref[...]
    if act == "relu":
        y = jnp.maximum(y, 0.0)
    elif act == "gelu":
        # TODO(synk): HF BERT uses exact erf-GELU; tanh approximation used here.
        y = jax.nn.gelu(y, approximate=True)
    elif act == "tanh":
        y = jnp.tanh(y)
    o_ref[...] = y.astype(o_ref.dtype)


def linear(x, w, b, act="none", out_dtype=jnp.float32):
    """y = act(x @ w + b). x:(M,K), w:(K,N) bf16, b:(N,) -> (M,N) f32."""
    M, K = x.shape
    Kw, N = w.shape
    assert K == Kw
    tn = _pick_tn(N)
    x = x.astype(jnp.bfloat16)               # bf16 MXU operands
    w = w.astype(jnp.bfloat16)               # (no-op if already bf16)
    b2 = b.reshape(1, N).astype(jnp.float32)
    return pl.pallas_call(
        functools.partial(_matmul_bias_act_kernel, act=act),
        out_shape=jax.ShapeDtypeStruct((M, N), out_dtype),
        grid_spec=pltpu.PrefetchScalarGridSpec(
            num_scalar_prefetch=0,
            grid=(N // tn,),                  # 1-2 steps for all shapes here
            in_specs=[
                pl.BlockSpec((M, K), lambda j: (0, 0)),
                pl.BlockSpec((K, tn), lambda j: (0, j)),
                pl.BlockSpec((1, tn), lambda j: (0, j)),
            ],
            out_specs=pl.BlockSpec((M, tn), lambda j: (0, j)),
        ),
        compiler_params=pltpu.CompilerParams(
            dimension_semantics=("parallel",),
            vmem_limit_bytes=_VMEM_LIMIT),
    )(x, w, b2)


# ------------------- Pallas kernel: LayerNorm (+fused residual) --------------
def _layernorm_kernel(x_ref, g_ref, b_ref, o_ref, *, eps):
    x = x_ref[...]
    mean = jnp.mean(x, axis=-1, keepdims=True)
    var = jnp.mean((x - mean) ** 2, axis=-1, keepdims=True)
    inv = jax.lax.rsqrt(var + eps)
    o_ref[...] = ((x - mean) * inv) * g_ref[...] + b_ref[...]


def _layernorm_residual_kernel(x_ref, r_ref, g_ref, b_ref, o_ref, *, eps):
    x = x_ref[...] + r_ref[...]               # fused residual add
    mean = jnp.mean(x, axis=-1, keepdims=True)
    var = jnp.mean((x - mean) ** 2, axis=-1, keepdims=True)
    inv = jax.lax.rsqrt(var + eps)
    o_ref[...] = ((x - mean) * inv) * g_ref[...] + b_ref[...]


def layernorm(x, g, b, residual=None, eps=LN_EPS):
    M, H = x.shape
    g2 = g.reshape(1, H)
    b2 = b.reshape(1, H)
    full = pl.BlockSpec((M, H), lambda i: (0, 0))
    vec = pl.BlockSpec((1, H), lambda i: (0, 0))
    if residual is None:
        return pl.pallas_call(
            functools.partial(_layernorm_kernel, eps=eps),
            out_shape=jax.ShapeDtypeStruct((M, H), jnp.float32),
            grid=(1,),
            in_specs=[full, vec, vec],
            out_specs=full,
        )(x, g2, b2)
    return pl.pallas_call(
        functools.partial(_layernorm_residual_kernel, eps=eps),
        out_shape=jax.ShapeDtypeStruct((M, H), jnp.float32),
        grid=(1,),
        in_specs=[full, full, vec, vec],
        out_specs=full,
    )(x, residual, g2, b2)


# --------------- Pallas kernel: attention, all heads in one step -------------
def _attention_kernel(q_ref, k_ref, v_ref, m_ref, o_ref, *, scale):
    q = q_ref[...].astype(jnp.bfloat16)        # (BH, S, dH)
    k = k_ref[...].astype(jnp.bfloat16)
    v = v_ref[...].astype(jnp.bfloat16)
    # Contract last dims directly (no explicit k.T materialization).
    s = jnp.einsum('bqd,bkd->bqk', q, k,
                   preferred_element_type=jnp.float32) * scale
    s = s + m_ref[...]                          # additive mask (BH, 1, S)
    s = s - jnp.max(s, axis=-1, keepdims=True)
    p = jnp.exp(s)
    p = p * pl.reciprocal(jnp.sum(p, axis=-1, keepdims=True), approx=True)
    o = jnp.einsum('bqk,bkd->bqd', p.astype(jnp.bfloat16), v,
                   preferred_element_type=jnp.float32)
    o_ref[...] = o.astype(o_ref.dtype)


def attention(q, k, v, addmask, scale):
    """q,k,v:(B*H, S, dH), addmask:(B*H, 1, S) additive -> (B*H, S, dH)."""
    BH, S, dH = q.shape
    full = pl.BlockSpec((BH, S, dH), lambda i: (0, 0, 0))
    mspec = pl.BlockSpec((BH, 1, S), lambda i: (0, 0, 0))
    return pl.pallas_call(
        functools.partial(_attention_kernel, scale=scale),
        out_shape=jax.ShapeDtypeStruct((BH, S, dH), jnp.float32),
        grid=(1,),                              # single step: BH*S*dH is tiny
        in_specs=[full, full, full, mspec],
        out_specs=full,
        compiler_params=pltpu.CompilerParams(
            dimension_semantics=("arbitrary",),
            vmem_limit_bytes=_VMEM_LIMIT),
    )(q, k, v, addmask)


# ------------------------ parameter init (deterministic) ---------------------
def init_params(key):
    def normal_bf16(k, shape):   # matmul weights streamed as bf16
        return (0.02 * jax.random.normal(k, shape, dtype=jnp.float32)
                ).astype(jnp.bfloat16)

    def normal_f32(k, shape):
        return 0.02 * jax.random.normal(k, shape, dtype=jnp.float32)

    keys = iter(jax.random.split(key, 8 + NUM_LAYERS * 8))
    p = {
        "word_emb": normal_f32(next(keys), (VOCAB, HIDDEN)),
        "pos_emb": normal_f32(next(keys), (MAX_POS, HIDDEN)),
        "type_emb": normal_f32(next(keys), (2, HIDDEN)),
        "emb_ln_g": jnp.ones((HIDDEN,), jnp.float32),
        "emb_ln_b": jnp.zeros((HIDDEN,), jnp.float32),
        "pool_w": normal_bf16(next(keys), (HIDDEN, HIDDEN)),
        "pool_b": jnp.zeros((HIDDEN,), jnp.float32),
        "head_w": normal_bf16(next(keys), (HIDDEN, HIDDEN)),   # nn.Linear(768,768)
        "head_b": jnp.zeros((HIDDEN,), jnp.float32),
        "layers": [],
    }
    for _ in range(NUM_LAYERS):
        layer = {
            # fused Q|K|V projection: (H, 3H) -> one pallas_call per layer
            "qkv_w": normal_bf16(next(keys), (HIDDEN, 3 * HIDDEN)),
            "qkv_b": jnp.zeros((3 * HIDDEN,), jnp.float32),
            "o_w": normal_bf16(next(keys), (HIDDEN, HIDDEN)),
            "o_b": jnp.zeros((HIDDEN,), jnp.float32),
            "ln1_g": jnp.ones((HIDDEN,), jnp.float32),
            "ln1_b": jnp.zeros((HIDDEN,), jnp.float32),
            "i_w": normal_bf16(next(keys), (HIDDEN, INTERMEDIATE)),
            "i_b": jnp.zeros((INTERMEDIATE,), jnp.float32),
            "f_w": normal_bf16(next(keys), (INTERMEDIATE, HIDDEN)),
            "f_b": jnp.zeros((HIDDEN,), jnp.float32),
            "ln2_g": jnp.ones((HIDDEN,), jnp.float32),
            "ln2_b": jnp.zeros((HIDDEN,), jnp.float32),
        }
        p["layers"].append(layer)
    return p


# ------------------------ Model1 forward (inference) -------------------------
def model1_forward(params, input_ids, mask):
    B, S = input_ids.shape
    H, nH, dH = HIDDEN, NUM_HEADS, HEAD_DIM

    # Embeddings (gather = glue) + LayerNorm (kernel)
    emb = (params["word_emb"][input_ids]
           + params["pos_emb"][:S][None, :, :]
           + params["type_emb"][0][None, None, :])
    x = emb.reshape(B * S, H)
    x = layernorm(x, params["emb_ln_g"], params["emb_ln_b"])

    # Additive attention mask, broadcast to every head: (B*nH, 1, S)
    addmask = (1.0 - mask.astype(jnp.float32)) * -10000.0
    addmask = jnp.broadcast_to(addmask[:, None, None, :],
                               (B, nH, 1, S)).reshape(B * nH, 1, S)

    def split_heads(t):   # (B*S, H) -> (B*nH, S, dH)
        return t.reshape(B, S, nH, dH).transpose(0, 2, 1, 3).reshape(B * nH, S, dH)

    def merge_heads(t):   # (B*nH, S, dH) -> (B*S, H)
        return t.reshape(B, nH, S, dH).transpose(0, 2, 1, 3).reshape(B * S, H)

    scale = 1.0 / math.sqrt(dH)
    for layer in params["layers"]:
        # fused QKV projection: one kernel launch, x streamed once
        qkv = linear(x, layer["qkv_w"], layer["qkv_b"])        # (B*S, 3H)
        q = split_heads(qkv[:, :H])
        k = split_heads(qkv[:, H:2 * H])
        v = split_heads(qkv[:, 2 * H:])
        ctx = merge_heads(attention(q, k, v, addmask, scale))
        attn_out = linear(ctx, layer["o_w"], layer["o_b"])
        x = layernorm(attn_out, layer["ln1_g"], layer["ln1_b"], residual=x)

        inter = linear(x, layer["i_w"], layer["i_b"], act="gelu")
        ffn = linear(inter, layer["f_w"], layer["f_b"])
        x = layernorm(ffn, layer["ln2_g"], layer["ln2_b"], residual=x)

    # Pooler: tanh(W * h_[CLS] + b)  -- single grid step (tk=tn=768)
    cls = x.reshape(B, S, H)[:, 0, :]
    pooled = linear(cls, params["pool_w"], params["pool_b"], act="tanh")

    # nn.Dropout(0.5) is identity at inference time.
    # Head: ReLU(Linear(768, 768))
    out = linear(pooled, params["head_w"], params["head_b"], act="relu")
    return out


# ----------------------------------- main ------------------------------------
if __name__ == "__main__":
    key = jax.random.PRNGKey(0)
    k_param, k_ids = jax.random.split(key)

    B, S = 2, 8
    params = init_params(k_param)
    input_ids = jax.random.randint(k_ids, (B, S), 0, VOCAB, dtype=jnp.int32)
    # last two tokens of sample 1 are padding
    mask = jnp.array([[1, 1, 1, 1, 1, 1, 1, 1],
                      [1, 1, 1, 1, 1, 1, 0, 0]], dtype=jnp.int32)

    out = model1_forward(params, input_ids, mask)
    out = jax.block_until_ready(out)
    assert out.shape == (B, HIDDEN) and out.dtype == jnp.float32
    assert bool(jnp.all(out >= 0.0))  # ReLU output
    print("KERNEL_OK")
</pallas_src>

<mosaic_0001>
module attributes {stable_mosaic.version = 11 : i64} {
  func.func @_layernorm_kernel(%arg0: i32, %arg1: memref<16x768xf32, #tpu.memory_space<vmem>>, %arg2: memref<1x768xf32, #tpu.memory_space<vmem>>, %arg3: memref<1x768xf32, #tpu.memory_space<vmem>>, %arg4: memref<16x768xf32, #tpu.memory_space<vmem>>) attributes {dimension_semantics = [#tpu.dimension_semantics<arbitrary>], iteration_bounds = array<i64: 1>, scalar_prefetch = 0 : i64, scratch_operands = 0 : i64, tpu.core_type = #tpu.core_type<tc>, window_params = [{pipeline_mode = #tpu.pipeline_mode<synchronous>, transform_indices = @transform_0, window_bounds = array<i64: 16, 768>}, {pipeline_mode = #tpu.pipeline_mode<synchronous>, transform_indices = @transform_1, window_bounds = array<i64: 1, 768>}, {pipeline_mode = #tpu.pipeline_mode<synchronous>, transform_indices = @transform_2, window_bounds = array<i64: 1, 768>}, {pipeline_mode = #tpu.pipeline_mode<synchronous>, transform_indices = @transform_3, window_bounds = array<i64: 16, 768>}]} {
    %c0 = arith.constant 0 : index
    %c0_0 = arith.constant 0 : index
    %0 = vector.load %arg1[%c0, %c0_0] : memref<16x768xf32, #tpu.memory_space<vmem>>, vector<16x768xf32>
    %cst = arith.constant dense<0.000000e+00> : vector<16xf32>
    %1 = vector.multi_reduction <add>, %0, %cst [1] : vector<16x768xf32> to vector<16xf32>
    %2 = vector.shape_cast %1 : vector<16xf32> to vector<16x1xf32>
    %cst_1 = arith.constant 7.680000e+02 : f32
    %3 = vector.broadcast %cst_1 : f32 to vector<16x1xf32>
    %4 = arith.divf %2, %3 : vector<16x1xf32>
    %5 = vector.broadcast %4 : vector<16x1xf32> to vector<16x768xf32>
    %6 = arith.subf %0, %5 : vector<16x768xf32>
    %7 = arith.mulf %6, %6 : vector<16x768xf32>
    %cst_2 = arith.constant dense<0.000000e+00> : vector<16xf32>
    %8 = vector.multi_reduction <add>, %7, %cst_2 [1] : vector<16x768xf32> to vector<16xf32>
    %9 = vector.shape_cast %8 : vector<16xf32> to vector<16x1xf32>
    %cst_3 = arith.constant 7.680000e+02 : f32
    %10 = vector.broadcast %cst_3 : f32 to vector<16x1xf32>
    %11 = arith.divf %9, %10 : vector<16x1xf32>
    %cst_4 = arith.constant 9.99999996E-13 : f32
    %12 = vector.broadcast %cst_4 : f32 to vector<16x1xf32>
    %13 = arith.addf %11, %12 : vector<16x1xf32>
    %14 = math.rsqrt %13 : vector<16x1xf32>
    %15 = vector.broadcast %4 : vector<16x1xf32> to vector<16x768xf32>
    %16 = arith.subf %0, %15 : vector<16x768xf32>
    %17 = vector.broadcast %14 : vector<16x1xf32> to vector<16x768xf32>
    %18 = arith.mulf %16, %17 : vector<16x768xf32>
    %c0_5 = arith.constant 0 : index
    %c0_6 = arith.constant 0 : index
    %19 = vector.load %arg2[%c0_5, %c0_6] : memref<1x768xf32, #tpu.memory_space<vmem>>, vector<1x768xf32>
    %20 = vector.broadcast %19 : vector<1x768xf32> to vector<16x768xf32>
    %21 = arith.mulf %18, %20 : vector<16x768xf32>
    %c0_7 = arith.constant 0 : index
    %c0_8 = arith.constant 0 : index
    %22 = vector.load %arg3[%c0_7, %c0_8] : memref<1x768xf32, #tpu.memory_space<vmem>>, vector<1x768xf32>
    %23 = vector.broadcast %22 : vector<1x768xf32> to vector<16x768xf32>
    %24 = arith.addf %21, %23 : vector<16x768xf32>
    %c0_9 = arith.constant 0 : index
    %c0_10 = arith.constant 0 : index
    %25 = vector.load %arg4[%c0_9, %c0_10] : memref<16x768xf32, #tpu.memory_space<vmem>>, vector<16x768xf32>
    tpu.vector_store %arg4[%c0_9, %c0_10], %24 {strides = array<i32>} : memref<16x768xf32, #tpu.memory_space<vmem>>, vector<16x768xf32>,
    return
  }
  func.func @transform_0(%arg0: i32) -> (i32, i32) {
    %c0_i32 = arith.constant 0 : i32
    %c0_i32_0 = arith.constant 0 : i32
    %c0_i32_1 = arith.constant 0 : i32
    return %c0_i32, %c0_i32_0 : i32, i32
  }
  func.func @transform_1(%arg0: i32) -> (i32, i32) {
    %c0_i32 = arith.constant 0 : i32
    %c0_i32_0 = arith.constant 0 : i32
    %c0_i32_1 = arith.constant 0 : i32
    return %c0_i32, %c0_i32_0 : i32, i32
  }
  func.func @transform_2(%arg0: i32) -> (i32, i32) {
    %c0_i32 = arith.constant 0 : i32
    %c0_i32_0 = arith.constant 0 : i32
    %c0_i32_1 = arith.constant 0 : i32
    return %c0_i32, %c0_i32_0 : i32, i32
  }
  func.func @transform_3(%arg0: i32) -> (i32, i32) {
    %c0_i32 = arith.constant 0 : i32
    %c0_i32_0 = arith.constant 0 : i32
    %c0_i32_1 = arith.constant 0 : i32
    return %c0_i32, %c0_i32_0 : i32, i32
  }
}

</mosaic_0001>

<llo_original>
// kernel: tpu_custom_call.1
$region0: #{tpu_custom_call.1}
  #allocation0 [shape = 'u32[]', space=smem, size = 0x4, offset = 0x4, fixed_abs, tag = 'smem constant byte address 0x4 - core index']
  #allocation1 [shape = 'u32[72,128]{1,0:T(1,128)}', space=vmem, size = 0x9000, scoped, tag = 'internal scratch']
  %s0 = inlined_call_operand.hbm [shape: f32[16,768], index: 0, kind: input, shape index: {}]
  %s1 = inlined_call_operand.hbm [shape: f32[1,768], index: 1, kind: input, shape index: {}]
  %s2 = inlined_call_operand.hbm [shape: f32[1,768], index: 2, kind: input, shape index: {}]
  %s3 = inlined_call_operand.hbm [shape: f32[16,768], index: 3, kind: output, shape index: {}]
  %s4 = sld [smem:[#allocation0]]
  $region34: #{tpu_custom_call.1} parent=0
    _
  %s6 = ssub.s32 1, %s4
  %s7 = scalar_select 0, %s6, %s4
  $region1: #{tpu_custom_call.1} parent=0
    #allocation2 [shape = 'u8[49152]{0}', space=vmem, size = 0xc000, scoped, tag = 'input window, operand 0, single buffered']
    #allocation3 [shape = 's32[1]{0}', space=sflag, size = 0x4, scoped, tag = 'scoped memory for tpu_custom_call.1']
    #allocation4 [shape = 's32[1]{0}', space=sflag, size = 0x4, scoped, tag = 'scoped memory for tpu_custom_call.1']
    #allocation5 [shape = 'u8[3072]{0}', space=vmem, size = 0xc00, scoped, tag = 'input window, operand 1, single buffered']
    #allocation6 [shape = 's32[1]{0}', space=sflag, size = 0x4, scoped, tag = 'scoped memory for tpu_custom_call.1']
    #allocation7 [shape = 'u8[3072]{0}', space=vmem, size = 0xc00, scoped, tag = 'input window, operand 2, single buffered']
    #allocation8 [shape = 'u8[49152]{0}', space=vmem, size = 0xc000, scoped, tag = 'output window, operand 0, single buffered']
    %8 = vsyncpa [#allocation3], 0
    %9 = vsyncpa [#allocation6], 0
    %10 = vsyncpa [#allocation4], 0
    // Predicated region
    $region2: #{tpu_custom_call.1} parent=1 // pred_check
      _
    $region3: #{tpu_custom_call.1} parent=1 // pred_check_branch
      %12 = sbr.rel (0) target = $region5
    $region4: #{tpu_custom_call.1} parent=1 // pred_region
      %14 = vsyncadd [#allocation3], 0
      %s15 = sshll.u32 %s0, 4
      %s16 = int_to_ptr.hbm [resolvable:$true] %s15
      %s17 = sshll.u32 [#allocation2], 4
      %s18 = int_to_ptr.vmem [resolvable:$true] %s17
      %23 = dma.hbm_to_vmem [thread:$0]  %s16, 1536, %s18, [#allocation3], 768, 768, 48
    $region5: #{tpu_custom_call.1} parent=1 // pred_fallthru
      _
    // Predicated region
    $region6: #{tpu_custom_call.1} parent=1 // pred_check
      _
    $region7: #{tpu_custom_call.1} parent=1 // pred_check_branch
      %25 = sbr.rel (0) target = $region9
    $region8: #{tpu_custom_call.1} parent=1 // pred_region
      %27 = vsyncadd [#allocation6], 0
      %s29 = sshll.u32 %s1, 4
      %s30 = int_to_ptr.hbm [resolvable:$true] %s29
      %s31 = sshll.u32 [#allocation5], 4
      %s32 = int_to_ptr.vmem [resolvable:$true] %s31
      %34 = dma.hbm_to_vmem [thread:$0]  %s30, 96, %s32, [#allocation6]
    $region9: #{tpu_custom_call.1} parent=1 // pred_fallthru
      _
    // Predicated region
    $region10: #{tpu_custom_call.1} parent=1 // pred_check
      _
    $region11: #{tpu_custom_call.1} parent=1 // pred_check_branch
      %36 = sbr.rel (0) target = $region13
    $region12: #{tpu_custom_call.1} parent=1 // pred_region
      %38 = vsyncadd [#allocation6], 0
      %s40 = sshll.u32 %s2, 4
      %s41 = int_to_ptr.hbm [resolvable:$true] %s40
      %s42 = sshll.u32 [#allocation7], 4
      %s43 = int_to_ptr.vmem [resolvable:$true] %s42
      %45 = dma.hbm_to_vmem [thread:$0]  %s41, 96, %s43, [#allocation6]
    $region13: #{tpu_custom_call.1} parent=1 // pred_fallthru
      _
    // Predicated region
    $region14: #{tpu_custom_call.1} parent=1 // pred_check
      _
    $region15: #{tpu_custom_call.1} parent=1 // pred_check_branch
      %47 = sbr.rel (0) target = $region17
    $region16: #{tpu_custom_call.1} parent=1 // pred_region
      %49 = dma.done [#allocation3], 1536
    $region17: #{tpu_custom_call.1} parent=1 // pred_fallthru
      _
    // Predicated region
    $region18: #{tpu_custom_call.1} parent=1 // pred_check
      _
    $region19: #{tpu_custom_call.1} parent=1 // pred_check_branch
      %51 = sbr.rel (0) target = $region21
    $region20: #{tpu_custom_call.1} parent=1 // pred_region
      %53 = dma.done [#allocation6], 96
    $region21: #{tpu_custom_call.1} parent=1 // pred_fallthru
      _
    // Predicated region
    $region22: #{tpu_custom_call.1} parent=1 // pred_check
      _
    $region23: #{tpu_custom_call.1} parent=1 // pred_check_branch
      %55 = sbr.rel (0) target = $region25
    $region24: #{tpu_custom_call.1} parent=1 // pred_region
      %57 = dma.done [#allocation6], 96
    $region25: #{tpu_custom_call.1} parent=1 // pred_fallthru
      _
    %v58 = vld [vmem:[#allocation2] sm:$0xff]
    %v59 = vld [vmem:[#allocation2 + $0x8] sm:$0xff]
    %v60 = vld [vmem:[#allocation2 + $0x10] sm:$0xff]
    %v61 = vld [vmem:[#allocation2 + $0x18] sm:$0xff]
    %v62 = vld [vmem:[#allocation2 + $0x20] sm:$0xff]
    %v63 = vld [vmem:[#allocation2 + $0x28] sm:$0xff]
    %v64 = vld [vmem:[#allocation2 + $0x30] sm:$0xff]
    %v65 = vld [vmem:[#allocation2 + $0x38] sm:$0xff]
    %v66 = vld [vmem:[#allocation2 + $0x40] sm:$0xff]
    %v67 = vld [vmem:[#allocation2 + $0x48] sm:$0xff]
    %v68 = vld [vmem:[#allocation2 + $0x50] sm:$0xff]
    %v69 = vld [vmem:[#allocation2 + $0x58] sm:$0xff]
    %v70 = vadd.f32 %v58, %v59
    %v71 = vadd.f32 %v70, %v60
    %v72 = vadd.f32 %v71, %v61
    %v73 = vadd.f32 %v72, %v62
    %v74 = vadd.f32 %v73, %v63
    %75 = vadd.xlane.f32.xlu0 %v74
    %v76 = vpop.xlane.xlu0 %75
    %v77 = vadd.f32 %v64, %v65
    %v78 = vadd.f32 %v77, %v66
    %v79 = vadd.f32 %v78, %v67
    %v80 = vadd.f32 %v79, %v68
    %v81 = vadd.f32 %v80, %v69
    %82 = vadd.xlane.f32.xlu0 %v81
    %v83 = vpop.xlane.xlu0 %82
    %v84 = vrcp.pop 768.0
    %v85 = vmul.f32 768.0, %v84
    %v86 = vsub.f32 1.0, %v85
    %v87 = vmul.f32 %v84, %v86
    %v88 = vadd.f32 %v84, %v87
    %vm89 = vweird.f32 %v84
    %v90 = vsel %vm89, %v84, %v88
    %v91 = vmul.f32 %v76, %v90
    %v92 = vmul.f32 %v83, %v90
    %v93 = vsub.f32 %v58, %v91
    %v94 = vsub.f32 %v59, %v91
    %v95 = vsub.f32 %v60, %v91
    %v96 = vsub.f32 %v61, %v91
    %v97 = vsub.f32 %v62, %v91
    %v98 = vsub.f32 %v63, %v91
    %v99 = vsub.f32 %v64, %v92
    %v100 = vsub.f32 %v65, %v92
    %v101 = vsub.f32 %v66, %v92
    %v102 = vsub.f32 %v67, %v92
    %v103 = vsub.f32 %v68, %v92
    %v104 = vsub.f32 %v69, %v92
    %v105 = vmul.f32 %v93, %v93
    %v106 = vmul.f32 %v94, %v94
    %v107 = vmul.f32 %v95, %v95
    %v108 = vmul.f32 %v96, %v96
    %v109 = vmul.f32 %v97, %v97
    %v110 = vmul.f32 %v98, %v98
    %v111 = vmul.f32 %v99, %v99
    %v112 = vmul.f32 %v100, %v100
    %v113 = vmul.f32 %v101, %v101
    %v114 = vmul.f32 %v102, %v102
    %v115 = vmul.f32 %v103, %v103
    %v116 = vmul.f32 %v104, %v104
    %v117 = vadd.f32 %v105, %v106
    %v118 = vadd.f32 %v117, %v107
    %v119 = vadd.f32 %v118, %v108
    %v120 = vadd.f32 %v119, %v109
    %v121 = vadd.f32 %v120, %v110
    %122 = vadd.xlane.f32.xlu0 %v121
    %v123 = vpop.xlane.xlu0 %122
    %v124 = vadd.f32 %v111, %v112
    %v125 = vadd.f32 %v124, %v113
    %v126 = vadd.f32 %v125, %v114
    %v127 = vadd.f32 %v126, %v115
    %v128 = vadd.f32 %v127, %v116
    %129 = vadd.xlane.f32.xlu0 %v128
    %v130 = vpop.xlane.xlu0 %129
    %v131 = vmul.f32 %v123, %v90
    %v132 = vmul.f32 %v130, %v90
    %v133 = vadd.f32 %v131, 1e-12
    %v134 = vadd.f32 %v132, 1e-12
    %v135 = vrsqrt.pop %v133
    %v136 = vmul.f32 %v135, %v133
    %v137 = vmul.f32 %v136, %v135
    %v138 = vmul.f32 0.5, %v137
    %v139 = vsub.f32 1.5, %v138
    %v140 = vmul.f32 %v135, %v139
    %vm141 = vweird.f32 %v133
    %vm142 = vweird.f32 %v135
    %vm143 = vmor %vm141, %vm142
    %v144 = vsel %vm143, %v135, %v140
    %v145 = vrsqrt.pop %v134
    %v146 = vmul.f32 %v145, %v134
    %v147 = vmul.f32 %v146, %v145
    %v148 = vmul.f32 0.5, %v147
    %v149 = vsub.f32 1.5, %v148
    %v150 = vmul.f32 %v145, %v149
    %vm151 = vweird.f32 %v134
    %vm152 = vweird.f32 %v145
    %vm153 = vmor %vm151, %vm152
    %v154 = vsel %vm153, %v145, %v150
    %v155 = vmul.f32 %v93, %v144
    %v156 = vmul.f32 %v94, %v144
    %v157 = vmul.f32 %v95, %v144
    %v158 = vmul.f32 %v96, %v144
    %v159 = vmul.f32 %v97, %v144
    %v160 = vmul.f32 %v98, %v144
    %v161 = vmul.f32 %v99, %v154
    %v162 = vmul.f32 %v100, %v154
    %v163 = vmul.f32 %v101, %v154
    %v164 = vmul.f32 %v102, %v154
    %v165 = vmul.f32 %v103, %v154
    %v166 = vmul.f32 %v104, %v154
    %v167 = vld [vmem:[#allocation5] sm:$0x3f]
    %v169 = vperm.slane %v167, 0
    %v170 = vperm.slane %v167, 1
    %v171 = vperm.slane %v167, 2
    %v172 = vperm.slane %v167, 3
    %v173 = vperm.slane %v167, 4
    %v174 = vperm.slane %v167, 5
    %v181 = vmul.f32 %v155, %v169
    %v182 = vmul.f32 %v156, %v170
    %v183 = vmul.f32 %v157, %v171
    %v184 = vmul.f32 %v158, %v172
    %v185 = vmul.f32 %v159, %v173
    %v186 = vmul.f32 %v160, %v174
    %v187 = vmul.f32 %v161, %v169
    %v188 = vmul.f32 %v162, %v170
    %v189 = vmul.f32 %v163, %v171
    %v190 = vmul.f32 %v164, %v172
    %v191 = vmul.f32 %v165, %v173
    %v192 = vmul.f32 %v166, %v174
    %v193 = vld [vmem:[#allocation7] sm:$0x3f]
    %v195 = vperm.slane %v193, 0
    %v196 = vperm.slane %v193, 1
    %v197 = vperm.slane %v193, 2
    %v198 = vperm.slane %v193, 3
    %v199 = vperm.slane %v193, 4
    %v200 = vperm.slane %v193, 5
    %v207 = vadd.f32 %v181, %v195
    %v208 = vadd.f32 %v182, %v196
    %v209 = vadd.f32 %v183, %v197
    %v210 = vadd.f32 %v184, %v198
    %v211 = vadd.f32 %v185, %v199
    %v212 = vadd.f32 %v186, %v200
    %v213 = vadd.f32 %v187, %v195
    %v214 = vadd.f32 %v188, %v196
    %v215 = vadd.f32 %v189, %v197
    %v216 = vadd.f32 %v190, %v198
    %v217 = vadd.f32 %v191, %v199
    %v218 = vadd.f32 %v192, %v200
    %219 = vst [vmem:[#allocation8] sm:$0xff] %v207
    %220 = vst [vmem:[#allocation8 + $0x8] sm:$0xff] %v208
    %221 = vst [vmem:[#allocation8 + $0x10] sm:$0xff] %v209
    %222 = vst [vmem:[#allocation8 + $0x18] sm:$0xff] %v210
    %223 = vst [vmem:[#allocation8 + $0x20] sm:$0xff] %v211
    %224 = vst [vmem:[#allocation8 + $0x28] sm:$0xff] %v212
    %225 = vst [vmem:[#allocation8 + $0x30] sm:$0xff] %v213
    %226 = vst [vmem:[#allocation8 + $0x38] sm:$0xff] %v214
    %227 = vst [vmem:[#allocation8 + $0x40] sm:$0xff] %v215
    %228 = vst [vmem:[#allocation8 + $0x48] sm:$0xff] %v216
    %229 = vst [vmem:[#allocation8 + $0x50] sm:$0xff] %v217
    %230 = vst [vmem:[#allocation8 + $0x58] sm:$0xff] %v218
    // Predicated region
    $region26: #{tpu_custom_call.1} parent=1 // pred_check
      _
    $region27: #{tpu_custom_call.1} parent=1 // pred_check_branch
      %232 = sbr.rel (0) target = $region29
    $region28: #{tpu_custom_call.1} parent=1 // pred_region
      %234 = vsyncadd [#allocation4], 0
      %s235 = sshll.u32 [#allocation8], 4
      %s236 = int_to_ptr.vmem [resolvable:$true] %s235
      %s237 = sshll.u32 %s3, 4
      %s238 = int_to_ptr.hbm [resolvable:$true] %s237
      %243 = dma.vmem_to_hbm [thread:$0]  %s236, 1536, %s238, [#allocation4], 768, 768, 48
    $region29: #{tpu_custom_call.1} parent=1 // pred_fallthru
      _
    // Predicated region
    $region30: #{tpu_custom_call.1} parent=1 // pred_check
      _
    $region31: #{tpu_custom_call.1} parent=1 // pred_check_branch
      %245 = sbr.rel (0) target = $region33
    $region32: #{tpu_custom_call.1} parent=1 // pred_region
      %247 = dma.done [#allocation4], 1536
    $region33: #{tpu_custom_call.1} parent=1 // pred_fallthru
      _
    %248 = vsyncpa [#allocation3], 1
    %249 = vsyncpa [#allocation6], 1
    %250 = vsyncpa [#allocation4], 1

</llo_original>
